<compile_context>
chip_gen: v7x
topology: tpu7x:2x2x1
jax: 0.10.0
libtpu: 0.0.40
codegen_flags: <defaults>
</compile_context>

<pallas_src>
import functools

import jax
import jax.numpy as jnp
from jax.experimental import pallas as pl
from jax.experimental.pallas import tpu as pltpu

_LANE = 128
_SUBLANE = 8
_MAX_BLOCK_ROWS = 2048           # 2048 x 128 f32 = 1 MiB per array per block
_SMALL_BATCH_THRESHOLD = 8192    # below this, fused XLA beats the custom-call launch
_VMEM_LIMIT_BYTES = 32 << 20     # 7 arrays x 2 buffers x 1 MiB = 14 MiB << 32 MiB


def _log_sigmoid(x):
    # Numerically stable log(sigmoid(x)) = min(x, 0) - log1p(exp(-|x|))
    return jnp.minimum(x, 0.0) - jnp.log1p(jnp.exp(-jnp.abs(x)))


def _dpo_math(pc, pr, rc, rr, beta, label_smoothing):
    """Shared DPO math (used by the kernel body and the small-batch XLA path)."""
    bl = beta * ((pc - pr) - (rc - rr))
    # -logsig(bl)*(1-l) - logsig(-bl)*l  ==  -logsig(bl) + l*bl   (exact algebra)
    losses = -_log_sigmoid(bl)
    if label_smoothing != 0.0:     # Python-level branch: no cost when l == 0
        losses = losses + label_smoothing * bl
    chosen_rewards = beta * (pc - rc)
    rejected_rewards = beta * (pr - rr)
    return losses, chosen_rewards, rejected_rewards


def _dpo_kernel(beta, label_smoothing,
                pc_ref, pr_ref, rc_ref, rr_ref,
                loss_ref, cr_ref, rr_out_ref):
    f32 = jnp.float32
    losses, cr, rro = _dpo_math(
        pc_ref[...].astype(f32), pr_ref[...].astype(f32),
        rc_ref[...].astype(f32), rr_ref[...].astype(f32),
        beta, label_smoothing)
    loss_ref[...] = losses.astype(loss_ref.dtype)
    cr_ref[...] = cr.astype(cr_ref.dtype)
    rr_out_ref[...] = rro.astype(rr_out_ref.dtype)


def dpo_loss(policy_chosen_logps,
             policy_rejected_logps,
             reference_chosen_logps,
             reference_rejected_logps,
             beta=0.1,
             label_smoothing=0.0,
             use_pallas=None):
    """DPOLoss.forward.

    All inputs: shape (batch,), floating point (math is done in float32).
    Returns (losses, chosen_rewards, rejected_rewards), each shape (batch,).
    `use_pallas=None` auto-dispatches: tiny batches go through plain (fused) XLA.
    """
    b = policy_chosen_logps.shape[0]
    beta = float(beta)
    label_smoothing = float(label_smoothing)

    if use_pallas is None:
        use_pallas = b >= _SMALL_BATCH_THRESHOLD
    if not use_pallas:
        # Launch overhead dominates for small batches; XLA fuses this in one pass.
        return _dpo_math(policy_chosen_logps, policy_rejected_logps,
                         reference_chosen_logps, reference_rejected_logps,
                         beta, label_smoothing)

    dtype = policy_chosen_logps.dtype

    # Lane-dense 2-D layout: (rows, 128).
    rows = pl.cdiv(b, _LANE)

    # Number of grid steps: enough to keep blocks <= _MAX_BLOCK_ROWS, and >= 2
    # once rows >= 128 so v7x's two TensorCores both get work (blocks stay >= 64
    # rows, well above the ~0.35 us per-step overhead threshold).
    num_blocks = max(1, pl.cdiv(rows, _MAX_BLOCK_ROWS))
    if rows >= 128:
        num_blocks = max(num_blocks, 2)

    if num_blocks == 1:
        # Block == full array: the (8,128) divisibility requirement is waived.
        block_rows = rows
    else:
        # Evenly sized blocks, rounded to a sublane multiple -> grid padding <= 7 rows.
        block_rows = ((pl.cdiv(rows, num_blocks) + _SUBLANE - 1) // _SUBLANE) * _SUBLANE

    rows_padded = num_blocks * block_rows
    padded_elems = rows_padded * _LANE
    needs_pad = padded_elems != b

    def prep(x):
        if needs_pad:
            x = jnp.pad(x, (0, padded_elems - b))   # zeros: log_sigmoid(0) is finite
        return x.reshape(rows_padded, _LANE)        # free view, no copy

    args = [prep(x) for x in (policy_chosen_logps,
                              policy_rejected_logps,
                              reference_chosen_logps,
                              reference_rejected_logps)]

    spec = pl.BlockSpec((block_rows, _LANE), lambda i: (i, 0))
    out_shape = jax.ShapeDtypeStruct((rows_padded, _LANE), dtype)
    kernel = functools.partial(_dpo_kernel, beta, label_smoothing)

    compiler_params = pltpu.CompilerParams(
        dimension_semantics=("parallel",),
        vmem_limit_bytes=_VMEM_LIMIT_BYTES,
        # Let XLA fuse the zero-pad producers into the custom call instead of
        # materializing padded input copies in HBM (only relevant when padding).
        allow_input_fusion=[True] * 4 if needs_pad else None,
    )

    losses, chosen_rewards, rejected_rewards = pl.pallas_call(
        kernel,
        grid=(num_blocks,),
        in_specs=[spec, spec, spec, spec],
        out_specs=[spec, spec, spec],
        out_shape=[out_shape, out_shape, out_shape],
        compiler_params=compiler_params,
    )(*args)

    def unprep(y):
        y = y.reshape(-1)          # free view
        return y[:b] if needs_pad else y

    return unprep(losses), unprep(chosen_rewards), unprep(rejected_rewards)


def _reference_dpo(pc, pr, rc, rr, beta, label_smoothing):
    logits = (pc - pr) - (rc - rr)
    losses = (-jax.nn.log_sigmoid(beta * logits) * (1.0 - label_smoothing)
              - jax.nn.log_sigmoid(-beta * logits) * label_smoothing)
    return losses, beta * (pc - rc), beta * (pr - rr)


if __name__ == "__main__":
    def make_inputs(batch, key):
        k1, k2, k3, k4 = jax.random.split(key, 4)
        # Log-probs are negative numbers; scale random normals accordingly.
        return (-jnp.abs(jax.random.normal(k1, (batch,), jnp.float32)) * 5.0,
                -jnp.abs(jax.random.normal(k2, (batch,), jnp.float32)) * 5.0,
                -jnp.abs(jax.random.normal(k3, (batch,), jnp.float32)) * 5.0,
                -jnp.abs(jax.random.normal(k4, (batch,), jnp.float32)) * 5.0)

    def check(out, ref):
        for got, want in zip(out, ref):
            assert got.shape == want.shape
            assert jnp.allclose(got, want, atol=1e-5, rtol=1e-6)

    key = jax.random.PRNGKey(0)

    # Case 1: batch=8, no label smoothing (Pallas path forced; single 1x128 block).
    inputs = make_inputs(8, key)
    out = dpo_loss(*inputs, beta=0.1, label_smoothing=0.0, use_pallas=True)
    jax.block_until_ready(out)
    check(out, _reference_dpo(*inputs, 0.1, 0.0))

    # Case 2: batch not a multiple of 128, nonzero label smoothing
    # (exercises ragged-tail padding + allow_input_fusion + smoothing algebra).
    inputs2 = make_inputs(200, jax.random.PRNGKey(1))
    out2 = dpo_loss(*inputs2, beta=0.25, label_smoothing=0.1, use_pallas=True)
    jax.block_until_ready(out2)
    check(out2, _reference_dpo(*inputs2, 0.25, 0.1))

    # Case 3: batch a multiple of 128 (no padding, no output slice; free views only).
    inputs3 = make_inputs(1024, jax.random.PRNGKey(2))
    out3 = dpo_loss(*inputs3, beta=0.1, label_smoothing=0.0, use_pallas=True)
    jax.block_until_ready(out3)
    check(out3, _reference_dpo(*inputs3, 0.1, 0.0))

    # Case 4: small-batch auto fast path (pure fused XLA, no Pallas launch).
    inputs4 = make_inputs(64, jax.random.PRNGKey(3))
    out4 = dpo_loss(*inputs4, beta=0.1, label_smoothing=0.05)
    jax.block_until_ready(out4)
    check(out4, _reference_dpo(*inputs4, 0.1, 0.05))

    print("KERNEL_OK")
</pallas_src>

<mosaic_0001>
module attributes {stable_mosaic.version = 11 : i64} {
  func.func @_dpo_kernel(%arg0: i32, %arg1: memref<1x128xf32, #tpu.memory_space<vmem>>, %arg2: memref<1x128xf32, #tpu.memory_space<vmem>>, %arg3: memref<1x128xf32, #tpu.memory_space<vmem>>, %arg4: memref<1x128xf32, #tpu.memory_space<vmem>>, %arg5: memref<1x128xf32, #tpu.memory_space<vmem>>, %arg6: memref<1x128xf32, #tpu.memory_space<vmem>>, %arg7: memref<1x128xf32, #tpu.memory_space<vmem>>) attributes {dimension_semantics = [#tpu.dimension_semantics<parallel>], iteration_bounds = array<i64: 1>, scalar_prefetch = 0 : i64, scratch_operands = 0 : i64, tpu.core_type = #tpu.core_type<tc>, window_params = [{transform_indices = @transform_0, window_bounds = array<i64: 1, 128>}, {transform_indices = @transform_1, window_bounds = array<i64: 1, 128>}, {transform_indices = @transform_2, window_bounds = array<i64: 1, 128>}, {transform_indices = @transform_3, window_bounds = array<i64: 1, 128>}, {transform_indices = @transform_4, window_bounds = array<i64: 1, 128>}, {transform_indices = @transform_5, window_bounds = array<i64: 1, 128>}, {transform_indices = @transform_6, window_bounds = array<i64: 1, 128>}]} {
    %c0 = arith.constant 0 : index
    %c0_0 = arith.constant 0 : index
    %0 = vector.load %arg1[%c0, %c0_0] : memref<1x128xf32, #tpu.memory_space<vmem>>, vector<1x128xf32>
    %c0_1 = arith.constant 0 : index
    %c0_2 = arith.constant 0 : index
    %1 = vector.load %arg2[%c0_1, %c0_2] : memref<1x128xf32, #tpu.memory_space<vmem>>, vector<1x128xf32>
    %c0_3 = arith.constant 0 : index
    %c0_4 = arith.constant 0 : index
    %2 = vector.load %arg3[%c0_3, %c0_4] : memref<1x128xf32, #tpu.memory_space<vmem>>, vector<1x128xf32>
    %c0_5 = arith.constant 0 : index
    %c0_6 = arith.constant 0 : index
    %3 = vector.load %arg4[%c0_5, %c0_6] : memref<1x128xf32, #tpu.memory_space<vmem>>, vector<1x128xf32>
    %4 = arith.subf %0, %1 : vector<1x128xf32>
    %5 = arith.subf %2, %3 : vector<1x128xf32>
    %6 = arith.subf %4, %5 : vector<1x128xf32>
    %cst = arith.constant 1.000000e-01 : f32
    %7 = vector.broadcast %cst : f32 to vector<1x128xf32>
    %8 = arith.mulf %7, %6 : vector<1x128xf32>
    %cst_7 = arith.constant 0.000000e+00 : f32
    %9 = vector.broadcast %cst_7 : f32 to vector<1x128xf32>
    %10 = arith.minimumf %8, %9 : vector<1x128xf32>
    %11 = math.absf %8 : vector<1x128xf32>
    %cst_8 = arith.constant 0.000000e+00 : f32
    %12 = vector.broadcast %cst_8 : f32 to vector<1x128xf32>
    %13 = arith.subf %12, %11 : vector<1x128xf32>
    %14 = math.exp %13 : vector<1x128xf32>
    %15 = math.log1p %14 : vector<1x128xf32>
    %16 = arith.subf %10, %15 : vector<1x128xf32>
    %cst_9 = arith.constant 0.000000e+00 : f32
    %17 = vector.broadcast %cst_9 : f32 to vector<1x128xf32>
    %18 = arith.subf %17, %16 : vector<1x128xf32>
    %19 = arith.subf %0, %2 : vector<1x128xf32>
    %cst_10 = arith.constant 1.000000e-01 : f32
    %20 = vector.broadcast %cst_10 : f32 to vector<1x128xf32>
    %21 = arith.mulf %20, %19 : vector<1x128xf32>
    %22 = arith.subf %1, %3 : vector<1x128xf32>
    %cst_11 = arith.constant 1.000000e-01 : f32
    %23 = vector.broadcast %cst_11 : f32 to vector<1x128xf32>
    %24 = arith.mulf %23, %22 : vector<1x128xf32>
    %c0_12 = arith.constant 0 : index
    %c0_13 = arith.constant 0 : index
    %25 = vector.load %arg5[%c0_12, %c0_13] : memref<1x128xf32, #tpu.memory_space<vmem>>, vector<1x128xf32>
    tpu.vector_store %arg5[%c0_12, %c0_13], %18 {strides = array<i32>} : memref<1x128xf32, #tpu.memory_space<vmem>>, vector<1x128xf32>,
    %c0_14 = arith.constant 0 : index
    %c0_15 = arith.constant 0 : index
    %26 = vector.load %arg6[%c0_14, %c0_15] : memref<1x128xf32, #tpu.memory_space<vmem>>, vector<1x128xf32>
    tpu.vector_store %arg6[%c0_14, %c0_15], %21 {strides = array<i32>} : memref<1x128xf32, #tpu.memory_space<vmem>>, vector<1x128xf32>,
    %c0_16 = arith.constant 0 : index
    %c0_17 = arith.constant 0 : index
    %27 = vector.load %arg7[%c0_16, %c0_17] : memref<1x128xf32, #tpu.memory_space<vmem>>, vector<1x128xf32>
    tpu.vector_store %arg7[%c0_16, %c0_17], %24 {strides = array<i32>} : memref<1x128xf32, #tpu.memory_space<vmem>>, vector<1x128xf32>,
    return
  }
  func.func @transform_0(%arg0: i32) -> (i32, i32) {
    %c0_i32 = arith.constant 0 : i32
    %c0_i32_0 = arith.constant 0 : i32
    return %arg0, %c0_i32 : i32, i32
  }
  func.func @transform_1(%arg0: i32) -> (i32, i32) {
    %c0_i32 = arith.constant 0 : i32
    %c0_i32_0 = arith.constant 0 : i32
    return %arg0, %c0_i32 : i32, i32
  }
  func.func @transform_2(%arg0: i32) -> (i32, i32) {
    %c0_i32 = arith.constant 0 : i32
    %c0_i32_0 = arith.constant 0 : i32
    return %arg0, %c0_i32 : i32, i32
  }
  func.func @transform_3(%arg0: i32) -> (i32, i32) {
    %c0_i32 = arith.constant 0 : i32
    %c0_i32_0 = arith.constant 0 : i32
    return %arg0, %c0_i32 : i32, i32
  }
  func.func @transform_4(%arg0: i32) -> (i32, i32) {
    %c0_i32 = arith.constant 0 : i32
    %c0_i32_0 = arith.constant 0 : i32
    return %arg0, %c0_i32 : i32, i32
  }
  func.func @transform_5(%arg0: i32) -> (i32, i32) {
    %c0_i32 = arith.constant 0 : i32
    %c0_i32_0 = arith.constant 0 : i32
    return %arg0, %c0_i32 : i32, i32
  }
  func.func @transform_6(%arg0: i32) -> (i32, i32) {
    %c0_i32 = arith.constant 0 : i32
    %c0_i32_0 = arith.constant 0 : i32
    return %arg0, %c0_i32 : i32, i32
  }
}

</mosaic_0001>

<llo_original>
// kernel: tpu_custom_call.1
$region0: #{tpu_custom_call.1}
  #allocation0 [shape = 'u32[]', space=smem, size = 0x4, offset = 0x4, fixed_abs, tag = 'smem constant byte address 0x4 - core index']
  #allocation1 [shape = 'u32[144,128]{1,0:T(1,128)}', space=vmem, size = 0x12000, scoped, tag = 'internal scratch']
  %s0 = inlined_call_operand.hbm [shape: f32[1,128], index: 0, kind: input, shape index: {}]
  %s1 = inlined_call_operand.vmem [shape: f32[1,128], index: 1, kind: input, shape index: {}]
  %s2 = inlined_call_operand.vmem [shape: f32[1,128], index: 2, kind: input, shape index: {}]
  %s3 = inlined_call_operand.vmem [shape: f32[1,128], index: 3, kind: input, shape index: {}]
  %s4 = inlined_call_operand.hbm [shape: f32[1,128], index: 4, kind: output, shape index: {0}]
  %s5 = inlined_call_operand.hbm [shape: f32[1,128], index: 5, kind: output, shape index: {1}]
  %s6 = inlined_call_operand.hbm [shape: f32[1,128], index: 6, kind: output, shape index: {2}]
  %7 = xla_tuple %s4, %s5, %s6
  %s8 = sld [smem:[#allocation0]]
  $region46: #{tpu_custom_call.1} parent=0
    _
  %s10 = ssub.s32 1, %s8
  %s11 = scalar_select 0, %s10, %s8
  $region1: #{tpu_custom_call.1} parent=0
    #allocation2 [shape = 'u8[512]{0}', space=vmem, size = 0x400, scoped, tag = 'input window, operand 0, single buffered']
    #allocation3 [shape = 's32[1]{0}', space=sflag, size = 0x4, scoped, tag = 'scoped memory for tpu_custom_call.1']
    #allocation4 [shape = 's32[1]{0}', space=sflag, size = 0x4, scoped, tag = 'scoped memory for tpu_custom_call.1']
    #allocation5 [shape = 'u8[512]{0}', space=vmem, size = 0x400, scoped, tag = 'output window, operand 0, single buffered']
    #allocation6 [shape = 'u8[512]{0}', space=vmem, size = 0x400, scoped, tag = 'output window, operand 1, single buffered']
    #allocation7 [shape = 's32[1]{0}', space=sflag, size = 0x4, scoped, tag = 'scoped memory for tpu_custom_call.1']
    #allocation8 [shape = 'u8[512]{0}', space=vmem, size = 0x400, scoped, tag = 'output window, operand 2, single buffered']
    %12 = vsyncpa [#allocation3], 0
    %13 = vsyncpa [#allocation4], 0
    %14 = vsyncpa [#allocation7], 0
    // Predicated region
    $region2: #{tpu_custom_call.1} parent=1 // pred_check
      _
    $region3: #{tpu_custom_call.1} parent=1 // pred_check_branch
      %16 = sbr.rel (0) target = $region5
    $region4: #{tpu_custom_call.1} parent=1 // pred_region
      %s18 = ssub.s32 16, 16
      %19 = vsyncadd [#allocation3], %s18
      %s21 = sshll.u32 [#allocation2], 4
      %s22 = int_to_ptr.vmem [resolvable:$true] %s21
      %24 = dma.hbm_to_vmem [thread:$0]  %s0, 16, %s22, [#allocation3]
    $region5: #{tpu_custom_call.1} parent=1 // pred_fallthru
      _
    // Predicated region
    $region6: #{tpu_custom_call.1} parent=1 // pred_check
      _
    $region7: #{tpu_custom_call.1} parent=1 // pred_check_branch
      %26 = sbr.rel (0) target = $region9
    $region8: #{tpu_custom_call.1} parent=1 // pred_region
      _
    $region9: #{tpu_custom_call.1} parent=1 // pred_fallthru
      _
    // Predicated region
    $region10: #{tpu_custom_call.1} parent=1 // pred_check
      _
    $region11: #{tpu_custom_call.1} parent=1 // pred_check_branch
      %28 = sbr.rel (0) target = $region13
    $region12: #{tpu_custom_call.1} parent=1 // pred_region
      _
    $region13: #{tpu_custom_call.1} parent=1 // pred_fallthru
      _
    // Predicated region
    $region14: #{tpu_custom_call.1} parent=1 // pred_check
      _
    $region15: #{tpu_custom_call.1} parent=1 // pred_check_branch
      %30 = sbr.rel (0) target = $region17
    $region16: #{tpu_custom_call.1} parent=1 // pred_region
      _
    $region17: #{tpu_custom_call.1} parent=1 // pred_fallthru
      _
    // Predicated region
    $region18: #{tpu_custom_call.1} parent=1 // pred_check
      _
    $region19: #{tpu_custom_call.1} parent=1 // pred_check_branch
      %32 = sbr.rel (0) target = $region21
    $region20: #{tpu_custom_call.1} parent=1 // pred_region
      %33 = dma.done [#allocation3], 16
    $region21: #{tpu_custom_call.1} parent=1 // pred_fallthru
      _
    %v34 = vld [vmem:[#allocation2] sm:$0x1]
    %v35 = vld [vmem:[%s1] sm:$0x1]
    %v36 = vld [vmem:[%s2] sm:$0x1]
    %v37 = vld [vmem:[%s3] sm:$0x1]
    %v38 = vsub.f32 %v34, %v35
    %v39 = vsub.f32 %v36, %v37
    %v40 = vsub.f32 %v38, %v39
    %v41 = vmul.f32 %v40, 0.1
    %v42 = vmin.f32 %v41, 0.0
    %v43 = vand.u32 2147483647, %v41
    %v44 = vsub.f32 0.0, %v43
    %v45 = vmul.f32 %v44, 1.442695
    %v46 = vpow.pop %v45
    %v47 = vadd.f32 %v46, 1.0
    %v48 = vlog2.pop %v47
    %v49 = vmul.f32 %v48, 0.6931472
    %v50 = vmul.f32 -0.5, %v46
    %v51 = vadd.f32 %v50, 1.0
    %v52 = vmul.f32 %v51, %v46
    %v53 = vand.u32 2147483647, %v46
    %vm54 = vcmp.lt.f32.partialorder %v53, 0.0004427343
    %v55 = vsel %vm54, %v52, %v49
    %v56 = vsub.f32 %v42, %v55
    %v57 = vsub.f32 0.0, %v56
    %v58 = vsub.f32 %v34, %v36
    %v59 = vmul.f32 %v58, 0.1
    %v60 = vsub.f32 %v35, %v37
    %v61 = vmul.f32 %v60, 0.1
    %62 = vst [vmem:[#allocation5] sm:$0x1] %v57
    %63 = vst [vmem:[#allocation6] sm:$0x1] %v59
    %64 = vst [vmem:[#allocation8] sm:$0x1] %v61
    // Predicated region
    $region22: #{tpu_custom_call.1} parent=1 // pred_check
      _
    $region23: #{tpu_custom_call.1} parent=1 // pred_check_branch
      %66 = sbr.rel (0) target = $region25
    $region24: #{tpu_custom_call.1} parent=1 // pred_region
      %s68 = ssub.s32 16, 16
      %69 = vsyncadd [#allocation4], %s68
      %s71 = sshll.u32 [#allocation5], 4
      %s72 = int_to_ptr.vmem [resolvable:$true] %s71
      %74 = dma.vmem_to_hbm [thread:$0]  %s72, 16, %s4, [#allocation4]
    $region25: #{tpu_custom_call.1} parent=1 // pred_fallthru
      _
    // Predicated region
    $region26: #{tpu_custom_call.1} parent=1 // pred_check
      _
    $region27: #{tpu_custom_call.1} parent=1 // pred_check_branch
      %76 = sbr.rel (0) target = $region29
    $region28: #{tpu_custom_call.1} parent=1 // pred_region
      %s78 = ssub.s32 16, 16
      %79 = vsyncadd [#allocation7], %s78
      %s81 = sshll.u32 [#allocation6], 4
      %s82 = int_to_ptr.vmem [resolvable:$true] %s81
      %84 = dma.vmem_to_hbm [thread:$0]  %s82, 16, %s5, [#allocation7]
    $region29: #{tpu_custom_call.1} parent=1 // pred_fallthru
      _
    // Predicated region
    $region30: #{tpu_custom_call.1} parent=1 // pred_check
      _
    $region31: #{tpu_custom_call.1} parent=1 // pred_check_branch
      %86 = sbr.rel (0) target = $region33
    $region32: #{tpu_custom_call.1} parent=1 // pred_region
      %s88 = ssub.s32 16, 16
      %89 = vsyncadd [#allocation7], %s88
      %s91 = sshll.u32 [#allocation8], 4
      %s92 = int_to_ptr.vmem [resolvable:$true] %s91
      %94 = dma.vmem_to_hbm [thread:$0]  %s92, 16, %s6, [#allocation7]
    $region33: #{tpu_custom_call.1} parent=1 // pred_fallthru
      _
    // Predicated region
    $region34: #{tpu_custom_call.1} parent=1 // pred_check
      _
    $region35: #{tpu_custom_call.1} parent=1 // pred_check_branch
      %96 = sbr.rel (0) target = $region37
    $region36: #{tpu_custom_call.1} parent=1 // pred_region
      %97 = dma.done [#allocation4], 16
    $region37: #{tpu_custom_call.1} parent=1 // pred_fallthru
      _
    // Predicated region
    $region38: #{tpu_custom_call.1} parent=1 // pred_check
      _
    $region39: #{tpu_custom_call.1} parent=1 // pred_check_branch
      %99 = sbr.rel (0) target = $region41
    $region40: #{tpu_custom_call.1} parent=1 // pred_region
      %100 = dma.done [#allocation7], 16
    $region41: #{tpu_custom_call.1} parent=1 // pred_fallthru
      _
    // Predicated region
    $region42: #{tpu_custom_call.1} parent=1 // pred_check
      _
    $region43: #{tpu_custom_call.1} parent=1 // pred_check_branch
      %102 = sbr.rel (0) target = $region45
    $region44: #{tpu_custom_call.1} parent=1 // pred_region
      %103 = dma.done [#allocation7], 16
    $region45: #{tpu_custom_call.1} parent=1 // pred_fallthru
      _
    %104 = vsyncpa [#allocation3], 1
    %105 = vsyncpa [#allocation4], 1
    %106 = vsyncpa [#allocation7], 1

</llo_original>
